<compile_context>
chip_gen: v6e
topology: v6e:2x2x1
jax: 0.10.0
libtpu: 0.0.40
codegen_flags: <defaults>
</compile_context>

<pallas_src>
import functools

import jax
import jax.numpy as jnp
from jax.experimental import pallas as pl
from jax.experimental.pallas import tpu as pltpu


def _round_up(a, b):
    return (a + b - 1) // b * b


def _physical_vmem_bytes():
    """Best-effort per-core VMEM capacity (only used to pick tiles / limits)."""
    try:
        kind = jax.devices()[0].device_kind.lower()
    except Exception:
        kind = ""
    if any(tag in kind for tag in ("v4", "v5", "v6")):
        return 128 << 20
    # Unknown or v7x: be conservative (v7x has 64 MiB VMEM per TensorCore).
    return 64 << 20


def _ffn_kernel(x_ref, gamma_ref, beta_ref, w1_ref, b1_ref, w2_ref, b2_ref,
                o_ref, *scratch, eps):
    """Grid: (row tile i ["parallel"], d_ff tile k ["arbitrary"/reduction])."""
    xn_ref = scratch[0]
    # For f32 outputs the output block itself is the accumulator: its block
    # index is constant across k, so it stays resident in VMEM for the k loop.
    acc_ref = scratch[1] if len(scratch) > 1 else o_ref
    k = pl.program_id(1)

    @pl.when(k == 0)
    def _():
        # LayerNorm in f32 (biased variance, eps inside rsqrt; matches
        # torch.nn.LayerNorm(eps=1e-6)); cache the result for all k steps.
        x = x_ref[...].astype(jnp.float32)
        mu = jnp.mean(x, axis=-1, keepdims=True)
        xc = x - mu
        var = jnp.mean(xc * xc, axis=-1, keepdims=True)
        xn = xc * jax.lax.rsqrt(var + eps)
        xn = xn * gamma_ref[...] + beta_ref[...]          # params already f32
        xn_ref[...] = xn.astype(xn_ref.dtype)
        # Fold "+ b2" into the accumulator init (no separate finalize add).
        acc_ref[...] = jnp.broadcast_to(b2_ref[...], acc_ref.shape).astype(acc_ref.dtype)

    # First matmul on this d_ff slice: (tile_n, d_model) @ (d_model, tile_ff).
    h = jnp.dot(xn_ref[...], w1_ref[...], preferred_element_type=jnp.float32)
    h = jnp.maximum(h + b1_ref[...], 0.0)

    # Second matmul: accumulate (tile_n, tile_ff) @ (tile_ff, d_model) in f32.
    acc_ref[...] += jnp.dot(h.astype(w2_ref.dtype), w2_ref[...],
                            preferred_element_type=jnp.float32)

    if acc_ref is not o_ref:   # static (trace-time) choice: non-f32 outputs only
        @pl.when(k == pl.num_programs(1) - 1)
        def _():
            o_ref[...] = acc_ref[...].astype(o_ref.dtype)


def position_wise_feed_forward(x, params, *, tile_n=None, tile_ff=None,
                               eps=1e-6, matmul_dtype=jnp.bfloat16):
    """x: [B, S, d_model] -> [B, S, d_model] (eval mode: dropout = identity)."""
    B, S, d_model = x.shape
    N = B * S
    d_ff = params["w1"].shape[1]

    out_dtype = x.dtype
    xbytes = jnp.dtype(x.dtype).itemsize
    obytes = jnp.dtype(out_dtype).itemsize
    wbytes = jnp.dtype(matmul_dtype).itemsize

    ROW = 16     # row (sublane) granularity: safe for f32 (8) and bf16 (16)
    LANE = 128   # lane granularity
    n_aligned = _round_up(N, ROW)
    ff_aligned = _round_up(d_ff, LANE)

    vmem_phys = _physical_vmem_bytes()
    big_vmem = vmem_phys >= (96 << 20)
    # Scoped-VMEM cap with slack below the physical size (Mosaic internal scratch).
    vmem_cap = (100 << 20) if big_vmem else (44 << 20)

    # ---- row tile ----------------------------------------------------------
    if tile_n is None:
        tile_n = 1024 if big_vmem else 512
    tile_n = max(_round_up(min(tile_n, n_aligned), ROW), ROW)
    # Bound ragged-N padding waste to < half a tile (keep >=128 rows for the MXU).
    while tile_n > 128 and 2 * (_round_up(N, tile_n) - N) >= tile_n:
        tile_n = max(_round_up(tile_n // 2, ROW), ROW)
    # On 2-TensorCore chips (v7x), ensure the "parallel" row axis has >=2 tiles
    # so both cores get work (only worth it once there are >=256 rows).
    if (not big_vmem) and _round_up(N, tile_n) == tile_n and n_aligned >= 256:
        tile_n = _round_up((n_aligned + 1) // 2, ROW)

    # ---- d_ff tile: prefer full weight residency (reduction axis == 1) ------
    if tile_ff is None:
        tile_ff = ff_aligned
    else:
        tile_ff = max(_round_up(min(tile_ff, ff_aligned), LANE), LANE)

    acc_in_out = jnp.dtype(out_dtype) == jnp.dtype(jnp.float32)

    def vmem_est(tn, tf):
        est = 2 * tn * d_model * xbytes            # x blocks (double-buffered)
        est += 2 * tn * d_model * obytes           # output blocks
        est += 2 * d_model * tf * wbytes           # w1 blocks
        est += 2 * tf * d_model * wbytes           # w2 blocks
        est += 2 * (tf + 3 * d_model) * 4          # b1 / b2 / gamma / beta
        est += tn * d_model * wbytes               # cached LayerNorm(x) scratch
        if not acc_in_out:
            est += tn * d_model * 4                # f32 accumulator scratch
        est += tn * tf * (4 + wbytes)              # h intermediate (+ its cast)
        return est

    # Shrink tile_ff, then tile_n, until the (x1.25 headroom) estimate fits.
    while int(vmem_est(tile_n, tile_ff) * 1.25) > vmem_cap:
        if tile_ff > 512:
            tile_ff = _round_up(tile_ff // 2, LANE)
        elif tile_n > 256:
            tile_n = _round_up(tile_n // 2, ROW)
        elif tile_ff > LANE:
            tile_ff = _round_up(tile_ff // 2, LANE)
        elif tile_n > ROW:
            tile_n = _round_up(tile_n // 2, ROW)
        else:
            break

    n_pad = _round_up(N, tile_n)
    ff_pad = _round_up(d_ff, tile_ff)
    num_row_tiles = n_pad // tile_n
    nk = ff_pad // tile_ff

    # ---- operand prep (exact zero-padding) ----------------------------------
    x2d = x.reshape(N, d_model)
    if n_pad != N:
        x2d = jnp.pad(x2d, ((0, n_pad - N), (0, 0)))

    w1 = params["w1"].astype(matmul_dtype)                    # (d_model, d_ff)
    w2 = params["w2"].astype(matmul_dtype)                    # (d_ff, d_model)
    b1 = params["b1"].astype(jnp.float32).reshape(1, d_ff)
    if ff_pad != d_ff:
        w1 = jnp.pad(w1, ((0, 0), (0, ff_pad - d_ff)))
        w2 = jnp.pad(w2, ((0, ff_pad - d_ff), (0, 0)))
        b1 = jnp.pad(b1, ((0, 0), (0, ff_pad - d_ff)))
    b2 = params["b2"].astype(jnp.float32).reshape(1, d_model)
    gamma = params["gamma"].astype(jnp.float32).reshape(1, d_model)
    beta = params["beta"].astype(jnp.float32).reshape(1, d_model)

    # Honest HBM-traffic estimate: weights are re-streamed once per row tile
    # unless the reduction axis collapses to 1 (constant index map -> 1 fetch).
    weight_fetches = 1 if nk == 1 else num_row_tiles
    weight_bytes = (w1.size + w2.size) * wbytes
    cost = pl.CostEstimate(
        flops=4 * n_pad * d_model * ff_pad,
        transcendentals=n_pad,                    # one rsqrt per token row
        bytes_accessed=int(n_pad * d_model * (xbytes + obytes)
                           + weight_fetches * weight_bytes
                           + (b1.size + b2.size + gamma.size + beta.size) * 4),
    )

    vmem_limit = int(min(max(vmem_est(tile_n, tile_ff) * 1.25, 16 << 20), vmem_cap))

    scratch_shapes = [pltpu.VMEM((tile_n, d_model), matmul_dtype)]  # cached LN(x)
    if not acc_in_out:
        scratch_shapes.append(pltpu.VMEM((tile_n, d_model), jnp.float32))

    out2d = pl.pallas_call(
        functools.partial(_ffn_kernel, eps=eps),
        out_shape=jax.ShapeDtypeStruct((n_pad, d_model), out_dtype),
        grid_spec=pltpu.PrefetchScalarGridSpec(
            num_scalar_prefetch=0,
            grid=(num_row_tiles, nk),
            in_specs=[
                pl.BlockSpec((tile_n, d_model), lambda i, k: (i, 0)),   # x rows
                pl.BlockSpec((1, d_model), lambda i, k: (0, 0)),        # gamma
                pl.BlockSpec((1, d_model), lambda i, k: (0, 0)),        # beta
                pl.BlockSpec((d_model, tile_ff), lambda i, k: (0, k)),  # w1 slice
                pl.BlockSpec((1, tile_ff), lambda i, k: (0, k)),        # b1 slice
                pl.BlockSpec((tile_ff, d_model), lambda i, k: (k, 0)),  # w2 slice
                pl.BlockSpec((1, d_model), lambda i, k: (0, 0)),        # b2
            ],
            out_specs=pl.BlockSpec((tile_n, d_model), lambda i, k: (i, 0)),
            scratch_shapes=scratch_shapes,
        ),
        compiler_params=pltpu.CompilerParams(
            dimension_semantics=("parallel", "arbitrary"),
            vmem_limit_bytes=vmem_limit,
        ),
        cost_estimate=cost,
    )(x2d, gamma, beta, w1, b1, w2, b2)

    if n_pad != N:
        out2d = out2d[:N]
    return out2d.reshape(B, S, d_model)


def make_params(key, d_model, d_ff, dtype=jnp.float32):
    k1, k2, k3, k4, k5, k6 = jax.random.split(key, 6)
    w1 = jax.random.normal(k1, (d_model, d_ff), dtype) / jnp.sqrt(d_model)
    b1 = jax.random.normal(k2, (d_ff,), dtype) * 0.01
    w2 = jax.random.normal(k3, (d_ff, d_model), dtype) / jnp.sqrt(d_ff)
    b2 = jax.random.normal(k4, (d_model,), dtype) * 0.01
    gamma = 1.0 + 0.1 * jax.random.normal(k5, (d_model,), dtype)
    beta = 0.1 * jax.random.normal(k6, (d_model,), dtype)
    return {"w1": w1, "b1": b1, "w2": w2, "b2": b2, "gamma": gamma, "beta": beta}


def reference(x, params, eps=1e-6):
    mu = jnp.mean(x, axis=-1, keepdims=True)
    var = jnp.mean((x - mu) ** 2, axis=-1, keepdims=True)
    xn = (x - mu) / jnp.sqrt(var + eps)
    xn = xn * params["gamma"] + params["beta"]
    h = jnp.maximum(xn @ params["w1"] + params["b1"], 0.0)
    return h @ params["w2"] + params["b2"]


if __name__ == "__main__":
    # TODO(synk): train-mode dropout (stochastic masking) is not implemented;
    # this kernel is the eval-mode forward (dropout = identity).
    B, S, d_model, d_ff = 2, 8, 32, 64
    key = jax.random.PRNGKey(0)
    kx, kp = jax.random.split(key)
    x = jax.random.normal(kx, (B, S, d_model), jnp.float32)
    params = make_params(kp, d_model, d_ff)

    out = position_wise_feed_forward(x, params)
    out = jax.block_until_ready(out)

    ref = reference(x, params)   # full-f32 reference; kernel matmuls are bf16
    assert out.shape == (B, S, d_model)
    assert jnp.allclose(out, ref, atol=3e-2, rtol=3e-2)
    print("KERNEL_OK")
</pallas_src>

<mosaic_0001>
module attributes {stable_mosaic.version = 11 : i64} {
  func.func @_ffn_kernel(%arg0: i32, %arg1: i32, %arg2: memref<16x32xf32, #tpu.memory_space<vmem>>, %arg3: memref<1x32xf32, #tpu.memory_space<vmem>>, %arg4: memref<1x32xf32, #tpu.memory_space<vmem>>, %arg5: memref<32x128xbf16, #tpu.memory_space<vmem>>, %arg6: memref<1x128xf32, #tpu.memory_space<vmem>>, %arg7: memref<128x32xbf16, #tpu.memory_space<vmem>>, %arg8: memref<1x32xf32, #tpu.memory_space<vmem>>, %arg9: memref<16x32xf32, #tpu.memory_space<vmem>>, %arg10: memref<16x32xbf16, #tpu.memory_space<vmem>>) attributes {dimension_semantics = [#tpu.dimension_semantics<parallel>, #tpu.dimension_semantics<arbitrary>], iteration_bounds = array<i64: 1, 1>, scalar_prefetch = 0 : i64, scratch_operands = 1 : i64, tpu.core_type = #tpu.core_type<tc>, window_params = [{transform_indices = @transform_0, window_bounds = array<i64: 16, 32>}, {pipeline_mode = #tpu.pipeline_mode<synchronous>, transform_indices = @transform_1, window_bounds = array<i64: 1, 32>}, {pipeline_mode = #tpu.pipeline_mode<synchronous>, transform_indices = @transform_2, window_bounds = array<i64: 1, 32>}, {transform_indices = @transform_3, window_bounds = array<i64: 32, 128>}, {transform_indices = @transform_4, window_bounds = array<i64: 1, 128>}, {transform_indices = @transform_5, window_bounds = array<i64: 128, 32>}, {pipeline_mode = #tpu.pipeline_mode<synchronous>, transform_indices = @transform_6, window_bounds = array<i64: 1, 32>}, {transform_indices = @transform_7, window_bounds = array<i64: 16, 32>}]} {
    %c0_i32 = arith.constant 0 : i32
    %0 = arith.cmpi eq, %arg1, %c0_i32 : i32
    %1 = arith.extui %0 : i1 to i32
    %c0_i32_0 = arith.constant 0 : i32
    %2 = arith.cmpi ne, %1, %c0_i32_0 : i32
    scf.if %2 {
      %c0_14 = arith.constant 0 : index
      %c0_15 = arith.constant 0 : index
      %17 = vector.load %arg2[%c0_14, %c0_15] : memref<16x32xf32, #tpu.memory_space<vmem>>, vector<16x32xf32>
      %cst_16 = arith.constant dense<0.000000e+00> : vector<16xf32>
      %18 = vector.multi_reduction <add>, %17, %cst_16 [1] : vector<16x32xf32> to vector<16xf32>
      %19 = vector.shape_cast %18 : vector<16xf32> to vector<16x1xf32>
      %cst_17 = arith.constant 3.200000e+01 : f32
      %20 = vector.broadcast %cst_17 : f32 to vector<16x1xf32>
      %21 = arith.divf %19, %20 : vector<16x1xf32>
      %22 = vector.broadcast %21 : vector<16x1xf32> to vector<16x32xf32>
      %23 = arith.subf %17, %22 : vector<16x32xf32>
      %24 = arith.mulf %23, %23 : vector<16x32xf32>
      %cst_18 = arith.constant dense<0.000000e+00> : vector<16xf32>
      %25 = vector.multi_reduction <add>, %24, %cst_18 [1] : vector<16x32xf32> to vector<16xf32>
      %26 = vector.shape_cast %25 : vector<16xf32> to vector<16x1xf32>
      %cst_19 = arith.constant 3.200000e+01 : f32
      %27 = vector.broadcast %cst_19 : f32 to vector<16x1xf32>
      %28 = arith.divf %26, %27 : vector<16x1xf32>
      %cst_20 = arith.constant 9.99999997E-7 : f32
      %29 = vector.broadcast %cst_20 : f32 to vector<16x1xf32>
      %30 = arith.addf %28, %29 : vector<16x1xf32>
      %31 = math.rsqrt %30 : vector<16x1xf32>
      %32 = vector.broadcast %31 : vector<16x1xf32> to vector<16x32xf32>
      %33 = arith.mulf %23, %32 : vector<16x32xf32>
      %c0_21 = arith.constant 0 : index
      %c0_22 = arith.constant 0 : index
      %34 = vector.load %arg3[%c0_21, %c0_22] : memref<1x32xf32, #tpu.memory_space<vmem>>, vector<1x32xf32>
      %35 = vector.broadcast %34 : vector<1x32xf32> to vector<16x32xf32>
      %36 = arith.mulf %33, %35 : vector<16x32xf32>
      %c0_23 = arith.constant 0 : index
      %c0_24 = arith.constant 0 : index
      %37 = vector.load %arg4[%c0_23, %c0_24] : memref<1x32xf32, #tpu.memory_space<vmem>>, vector<1x32xf32>
      %38 = vector.broadcast %37 : vector<1x32xf32> to vector<16x32xf32>
      %39 = arith.addf %36, %38 : vector<16x32xf32>
      %40 = arith.truncf %39 : vector<16x32xf32> to vector<16x32xbf16>
      %c0_25 = arith.constant 0 : index
      %c0_26 = arith.constant 0 : index
      %41 = vector.load %arg10[%c0_25, %c0_26] : memref<16x32xbf16, #tpu.memory_space<vmem>>, vector<16x32xbf16>
      tpu.vector_store %arg10[%c0_25, %c0_26], %40 {strides = array<i32>} : memref<16x32xbf16, #tpu.memory_space<vmem>>, vector<16x32xbf16>,
      %c0_27 = arith.constant 0 : index
      %c0_28 = arith.constant 0 : index
      %42 = vector.load %arg8[%c0_27, %c0_28] : memref<1x32xf32, #tpu.memory_space<vmem>>, vector<1x32xf32>
      %43 = vector.shape_cast %42 : vector<1x32xf32> to vector<1x32xf32>
      %44 = vector.broadcast %43 : vector<1x32xf32> to vector<16x32xf32>
      %c0_29 = arith.constant 0 : index
      %c0_30 = arith.constant 0 : index
      %45 = vector.load %arg9[%c0_29, %c0_30] : memref<16x32xf32, #tpu.memory_space<vmem>>, vector<16x32xf32>
      tpu.vector_store %arg9[%c0_29, %c0_30], %44 {strides = array<i32>} : memref<16x32xf32, #tpu.memory_space<vmem>>, vector<16x32xf32>,
    } else {
    }
    %c0 = arith.constant 0 : index
    %c0_1 = arith.constant 0 : index
    %3 = vector.load %arg10[%c0, %c0_1] : memref<16x32xbf16, #tpu.memory_space<vmem>>, vector<16x32xbf16>
    %c0_2 = arith.constant 0 : index
    %c0_3 = arith.constant 0 : index
    %4 = vector.load %arg5[%c0_2, %c0_3] : memref<32x128xbf16, #tpu.memory_space<vmem>>, vector<32x128xbf16>
    %cst = arith.constant dense<0.000000e+00> : vector<16x128xf32>
    %5 = tpu.matmul %3, %4, %cst {dimension_numbers = #tpu.dot_dimension_numbers<[1], [0], [0], [1], [0, 0, 1, 1], [], []>} : vector<16x32xbf16>, vector<32x128xbf16>, vector<16x128xf32> -> vector<16x128xf32>
    %c0_4 = arith.constant 0 : index
    %c0_5 = arith.constant 0 : index
    %6 = vector.load %arg6[%c0_4, %c0_5] : memref<1x128xf32, #tpu.memory_space<vmem>>, vector<1x128xf32>
    %7 = vector.broadcast %6 : vector<1x128xf32> to vector<16x128xf32>
    %8 = arith.addf %5, %7 : vector<16x128xf32>
    %cst_6 = arith.constant 0.000000e+00 : f32
    %9 = vector.broadcast %cst_6 : f32 to vector<16x128xf32>
    %10 = arith.maximumf %8, %9 : vector<16x128xf32>
    %c0_7 = arith.constant 0 : index
    %c0_8 = arith.constant 0 : index
    %11 = vector.load %arg9[%c0_7, %c0_8] : memref<16x32xf32, #tpu.memory_space<vmem>>, vector<16x32xf32>
    %12 = arith.truncf %10 : vector<16x128xf32> to vector<16x128xbf16>
    %c0_9 = arith.constant 0 : index
    %c0_10 = arith.constant 0 : index
    %13 = vector.load %arg7[%c0_9, %c0_10] : memref<128x32xbf16, #tpu.memory_space<vmem>>, vector<128x32xbf16>
    %cst_11 = arith.constant dense<0.000000e+00> : vector<16x32xf32>
    %14 = tpu.matmul %12, %13, %cst_11 {dimension_numbers = #tpu.dot_dimension_numbers<[1], [0], [0], [1], [0, 0, 1, 1], [], []>} : vector<16x128xbf16>, vector<128x32xbf16>, vector<16x32xf32> -> vector<16x32xf32>
    %15 = arith.addf %11, %14 : vector<16x32xf32>
    %c0_12 = arith.constant 0 : index
    %c0_13 = arith.constant 0 : index
    %16 = vector.load %arg9[%c0_12, %c0_13] : memref<16x32xf32, #tpu.memory_space<vmem>>, vector<16x32xf32>
    tpu.vector_store %arg9[%c0_12, %c0_13], %15 {strides = array<i32>} : memref<16x32xf32, #tpu.memory_space<vmem>>, vector<16x32xf32>,
    return
  }
  func.func @transform_0(%arg0: i32, %arg1: i32) -> (i32, i32) {
    %c0_i32 = arith.constant 0 : i32
    %c0_i32_0 = arith.constant 0 : i32
    return %arg0, %c0_i32 : i32, i32
  }
  func.func @transform_1(%arg0: i32, %arg1: i32) -> (i32, i32) {
    %c0_i32 = arith.constant 0 : i32
    %c0_i32_0 = arith.constant 0 : i32
    %c0_i32_1 = arith.constant 0 : i32
    return %c0_i32, %c0_i32_0 : i32, i32
  }
  func.func @transform_2(%arg0: i32, %arg1: i32) -> (i32, i32) {
    %c0_i32 = arith.constant 0 : i32
    %c0_i32_0 = arith.constant 0 : i32
    %c0_i32_1 = arith.constant 0 : i32
    return %c0_i32, %c0_i32_0 : i32, i32
  }
  func.func @transform_3(%arg0: i32, %arg1: i32) -> (i32, i32) {
    %c0_i32 = arith.constant 0 : i32
    %c0_i32_0 = arith.constant 0 : i32
    return %c0_i32, %arg1 : i32, i32
  }
  func.func @transform_4(%arg0: i32, %arg1: i32) -> (i32, i32) {
    %c0_i32 = arith.constant 0 : i32
    %c0_i32_0 = arith.constant 0 : i32
    return %c0_i32, %arg1 : i32, i32
  }
  func.func @transform_5(%arg0: i32, %arg1: i32) -> (i32, i32) {
    %c0_i32 = arith.constant 0 : i32
    %c0_i32_0 = arith.constant 0 : i32
    return %arg1, %c0_i32 : i32, i32
  }
  func.func @transform_6(%arg0: i32, %arg1: i32) -> (i32, i32) {
    %c0_i32 = arith.constant 0 : i32
    %c0_i32_0 = arith.constant 0 : i32
    %c0_i32_1 = arith.constant 0 : i32
    return %c0_i32, %c0_i32_0 : i32, i32
  }
  func.func @transform_7(%arg0: i32, %arg1: i32) -> (i32, i32) {
    %c0_i32 = arith.constant 0 : i32
    %c0_i32_0 = arith.constant 0 : i32
    return %arg0, %c0_i32 : i32, i32
  }
}

</mosaic_0001>

<llo_original>
// kernel: tpu_custom_call.1
$region0: #{tpu_custom_call.1}
  #allocation0 [shape = 'u32[]', space=smem, size = 0x4, offset = 0x4, fixed_abs, tag = 'smem constant byte address 0x4 - core index']
  #allocation1 [shape = 'u32[144,128]{1,0:T(1,128)}', space=vmem, size = 0x12000, scoped, tag = 'internal scratch']
  #allocation2 [shape = 'bf16[16,32]{1,0:T(8,128)(2,1)}', space=vmem, size = 0x1000, scoped, tag = 'scratch operand']
  %s0 = inlined_call_operand.vmem [shape: f32[16,32], index: 0, kind: input, shape index: {}]
  %s1 = inlined_call_operand.vmem [shape: f32[1,32], index: 1, kind: input, shape index: {}]
  %s2 = inlined_call_operand.vmem [shape: f32[1,32], index: 2, kind: input, shape index: {}]
  %s3 = inlined_call_operand.vmem [shape: bf16[32,128], index: 3, kind: input, shape index: {}]
  %s4 = inlined_call_operand.vmem [shape: f32[1,128], index: 4, kind: input, shape index: {}]
  %s5 = inlined_call_operand.vmem [shape: bf16[128,32], index: 5, kind: input, shape index: {}]
  %s6 = inlined_call_operand.vmem [shape: f32[1,32], index: 6, kind: input, shape index: {}]
  %s7 = inlined_call_operand.hbm [shape: f32[16,32], index: 7, kind: output, shape index: {}]
  %s8 = sld [smem:[#allocation0]]
  $region42: #{tpu_custom_call.1} parent=0
    _
  %s10 = ssub.s32 1, %s8
  %s11 = scalar_select 0, %s10, %s8
  $region1: #{tpu_custom_call.1} parent=0
    #allocation3 [shape = 'u8[8192]{0}', space=vmem, size = 0x2000, scoped, tag = 'output window, operand 0, single buffered']
    #allocation4 [shape = 's32[1]{0}', space=sflag, size = 0x4, scoped, tag = 'scoped memory for tpu_custom_call.1']
    %12 = vsyncpa [#allocation4], 0
    // Predicated region
    $region2: #{tpu_custom_call.1} parent=1 // pred_check
      _
    $region3: #{tpu_custom_call.1} parent=1 // pred_check_branch
      %14 = sbr.rel (0) target = $region5
    $region4: #{tpu_custom_call.1} parent=1 // pred_region
      _
    $region5: #{tpu_custom_call.1} parent=1 // pred_fallthru
      _
    // Predicated region
    $region6: #{tpu_custom_call.1} parent=1 // pred_check
      _
    $region7: #{tpu_custom_call.1} parent=1 // pred_check_branch
      %16 = sbr.rel (0) target = $region9
    $region8: #{tpu_custom_call.1} parent=1 // pred_region
      _
    $region9: #{tpu_custom_call.1} parent=1 // pred_fallthru
      _
    // Predicated region
    $region10: #{tpu_custom_call.1} parent=1 // pred_check
      _
    $region11: #{tpu_custom_call.1} parent=1 // pred_check_branch
      %18 = sbr.rel (0) target = $region13
    $region12: #{tpu_custom_call.1} parent=1 // pred_region
      _
    $region13: #{tpu_custom_call.1} parent=1 // pred_fallthru
      _
    // Predicated region
    $region14: #{tpu_custom_call.1} parent=1 // pred_check
      _
    $region15: #{tpu_custom_call.1} parent=1 // pred_check_branch
      %20 = sbr.rel (0) target = $region17
    $region16: #{tpu_custom_call.1} parent=1 // pred_region
      _
    $region17: #{tpu_custom_call.1} parent=1 // pred_fallthru
      _
    // Predicated region
    $region18: #{tpu_custom_call.1} parent=1 // pred_check
      _
    $region19: #{tpu_custom_call.1} parent=1 // pred_check_branch
      %22 = sbr.rel (0) target = $region21
    $region20: #{tpu_custom_call.1} parent=1 // pred_region
      _
    $region21: #{tpu_custom_call.1} parent=1 // pred_fallthru
      _
    // Predicated region
    $region22: #{tpu_custom_call.1} parent=1 // pred_check
      _
    $region23: #{tpu_custom_call.1} parent=1 // pred_check_branch
      %24 = sbr.rel (0) target = $region25
    $region24: #{tpu_custom_call.1} parent=1 // pred_region
      _
    $region25: #{tpu_custom_call.1} parent=1 // pred_fallthru
      _
    // Predicated region
    $region26: #{tpu_custom_call.1} parent=1 // pred_check
      _
    $region27: #{tpu_custom_call.1} parent=1 // pred_check_branch
      %26 = sbr.rel (0) target = $region29
    $region28: #{tpu_custom_call.1} parent=1 // pred_region
      _
    $region29: #{tpu_custom_call.1} parent=1 // pred_fallthru
      _
    %p28 = scmp.eq.s32.totalorder 0, 0
    // Predicated region
    $region30: #{tpu_custom_call.1} parent=1 // pred_check
      %p29 = pneg %p28
    $region31: #{tpu_custom_call.1} parent=1 // pred_check_branch
      %31 = sbr.rel (%p29) target = $region33
    $region32: #{tpu_custom_call.1} parent=1 // pred_region
      %v32 = vld [vmem:[%s0] sm:$0xff]
      %v33 = vld [vmem:[%s0 + $0x8] sm:$0xff]
      %vm34 = vcmask 261120
      %v35 = vsel %vm34, %v32, 0.0
      %36 = vadd.xlane.f32.xlu0 %v35
      %v37 = vpop.xlane.xlu0 %36
      %v38 = vsel %vm34, %v33, 0.0
      %39 = vadd.xlane.f32.xlu0 %v38
      %v40 = vpop.xlane.xlu0 %39
      %v41 = vrcp.pop 32.0
      %v42 = vmul.f32 %v37, %v41
      %v43 = vmul.f32 %v40, %v41
      %v44 = vsub.f32 %v32, %v42
      %v45 = vsub.f32 %v33, %v43
      %v46 = vmul.f32 %v44, %v44
      %v47 = vmul.f32 %v45, %v45
      %v48 = vsel %vm34, %v46, 0.0
      %49 = vadd.xlane.f32.xlu0 %v48
      %v50 = vpop.xlane.xlu0 %49
      %v51 = vsel %vm34, %v47, 0.0
      %52 = vadd.xlane.f32.xlu0 %v51
      %v53 = vpop.xlane.xlu0 %52
      %v54 = vmul.f32 %v50, %v41
      %v55 = vmul.f32 %v53, %v41
      %v56 = vadd.f32 %v54, 1e-06
      %v57 = vadd.f32 %v55, 1e-06
      %v58 = vrsqrt.pop %v56
      %v59 = vrsqrt.pop %v57
      %v60 = vmul.f32 %v44, %v58
      %v61 = vmul.f32 %v45, %v59
      %v62 = vld [vmem:[%s1] sm:$0x1]
      %v64 = vlaneseq
      %v65 = vshrl.u32 %v64, 7
      %v66 = vsub.s32 0, %v65
      %v67 = vrot.slane %v62, %v66
      %v69 = vmul.f32 %v60, %v67
      %v70 = vmul.f32 %v61, %v67
      %v71 = vld [vmem:[%s2] sm:$0x1]
      %v73 = vlaneseq
      %v74 = vshrl.u32 %v73, 7
      %v75 = vsub.s32 0, %v74
      %v76 = vrot.slane %v71, %v75
      %v78 = vadd.f32 %v69, %v76
      %v79 = vadd.f32 %v70, %v76
      %v80 = vpack.c.bf16 %v79, %v78
      %v82 = vunpack.c.l.b16 %v80
      %v83 = vunpack.c.h.b16 %v80
      %v84 = vpack.c.b16 %v82, %v82
      %v85 = vpack.c.b16 %v83, %v83
      %vm88 = vcmask 257024
      %89 = vst.msk [vmem:[#allocation2] sm:$0xf] %vm88, %v84
      %90 = vst.msk [vmem:[#allocation2 + $0x4] sm:$0xf] %vm88, %v85
      %v91 = vld [vmem:[%s6] sm:$0x1]
      %v93 = vlaneseq
      %v94 = vshrl.u32 %v93, 7
      %v95 = vsub.s32 0, %v94
      %v96 = vrot.slane %v91, %v95
      %98 = vst.msk [vmem:[#allocation3] sm:$0xff] %vm34, %v96
      %99 = vst.msk [vmem:[#allocation3 + $0x8] sm:$0xff] %vm34, %v96
    $region33: #{tpu_custom_call.1} parent=1 // pred_fallthru
      _
    %v100 = vld [vmem:[#allocation2] sm:$0xf]
    %v101 = vld [vmem:[#allocation2 + $0x4] sm:$0xf]
    %v102 = vld [vmem:[%s3] sm:$0xf]
    %v103 = vld [vmem:[%s3 + $0x4] sm:$0xf]
    %v104 = vld [vmem:[%s3 + $0x8] sm:$0xf]
    %v105 = vld [vmem:[%s3 + $0xc] sm:$0xf]
    %v106 = vld [vmem:[%s4] sm:$0x1]
    %v108 = vlaneseq
    %v109 = vshrl.u32 %v108, 7
    %v110 = vsub.s32 0, %v109
    %v111 = vrot.slane %v106, %v110
    %v115 = vunpack.c.l.b16 %v100
    %v116 = vunpack.c.l.b16 %v101
    %v117 = vpack.c.b16 %v116, %v115
    %v122 = vunpack.c.l.b16 %v102
    %v123 = vunpack.c.l.b16 %v103
    %v124 = vunpack.c.l.b16 %v104
    %v125 = vunpack.c.l.b16 %v105
    %v126 = vpack.c.b16 %v123, %v122
    %v127 = vpack.c.b16 %v125, %v124
    %vm130 = vcmask 261120
    %v132 = vsel %vm130, %v117, 0
    %134 = vmatprep.subr.bf16.mxu0 0
    %135 = vmatpush1.bf16.msra.mxu0 0
    %136 = vmatprep.subr.bf16.mxu0 0
    %137 = vmatpush1.bf16.msra.mxu0 0
    %138 = vmatprep.subr.bf16.mxu0 0
    %139 = vmatpush1.bf16.msra.mxu0 0
    %140 = vmatprep.subr.bf16.mxu0 0
    %141 = vmatpush1.bf16.msra.mxu0 0
    %142 = vmatprep.subr.bf16.mxu0 0
    %143 = vmatpush1.bf16.msra.mxu0 0
    %144 = vmatprep.subr.bf16.mxu0 0
    %145 = vmatpush1.bf16.msra.mxu0 0
    %146 = vmatprep.subr.bf16.mxu0 0
    %147 = vmatpush1.bf16.msra.mxu0 %v127
    %148 = vmatprep.subr.bf16.mxu0 0
    %149 = vmatpush1.bf16.msra.mxu0 %v126
    %150 = vmatprep.subr.bf16.mxu0 0
    %151 = vmatpush2.bf16.msra.mxu0 0
    %152 = vmatprep.subr.bf16.mxu0 0
    %153 = vmatpush2.bf16.msra.mxu0 0
    %154 = vmatprep.subr.bf16.mxu0 0
    %155 = vmatpush2.bf16.msra.mxu0 0
    %156 = vmatprep.subr.bf16.mxu0 0
    %157 = vmatpush2.bf16.msra.mxu0 0
    %158 = vmatprep.subr.bf16.mxu0 0
    %159 = vmatpush2.bf16.msra.mxu0 0
    %160 = vmatprep.subr.bf16.mxu0 0
    %161 = vmatpush2.bf16.msra.mxu0 0
    %162 = vmatprep.subr.bf16.mxu0 0
    %163 = vmatpush2.bf16.msra.mxu0 0
    %164 = vmatprep.subr.bf16.mxu0 0
    %165 = vmatpush2.bf16.msra.mxu0 0
    %166 = vmatprep.mubr.bf16.mxu0 0
    %167 = vmatmul.mubr.bf16.gmra.mxu0 %v132
    %v168 = vpop.f32.mrf.mxu0
    %v169 = vadd.f32 %v111, %v168
    %v170 = vpop.f32.mrf.mxu0
    %v171 = vpop.f32.mrf.mxu0
    %v172 = vadd.f32 %v111, %v171
    %v173 = vpop.f32.mrf.mxu0
    %174 = vdwg.mxu0
    %v175 = vmax.f32 %v169, 0.0
    %v176 = vmax.f32 %v172, 0.0
    %v177 = vld [vmem:[#allocation3] sm:$0xff]
    %v178 = vld [vmem:[#allocation3 + $0x8] sm:$0xff]
    %v179 = vpack.c.bf16 %v176, %v175
    %v180 = vld [vmem:[%s5] sm:$0xf]
    %v181 = vld [vmem:[%s5 + $0x4] sm:$0xf]
    %v182 = vld [vmem:[%s5 + $0x8] sm:$0xf]
    %v183 = vld [vmem:[%s5 + $0xc] sm:$0xf]
    %v184 = vld [vmem:[%s5 + $0x10] sm:$0xf]
    %v185 = vld [vmem:[%s5 + $0x14] sm:$0xf]
    %v186 = vld [vmem:[%s5 + $0x18] sm:$0xf]
    %v187 = vld [vmem:[%s5 + $0x1c] sm:$0xf]
    %v188 = vld [vmem:[%s5 + $0x20] sm:$0xf]
    %v189 = vld [vmem:[%s5 + $0x24] sm:$0xf]
    %v190 = vld [vmem:[%s5 + $0x28] sm:$0xf]
    %v191 = vld [vmem:[%s5 + $0x2c] sm:$0xf]
    %v192 = vld [vmem:[%s5 + $0x30] sm:$0xf]
    %v193 = vld [vmem:[%s5 + $0x34] sm:$0xf]
    %v194 = vld [vmem:[%s5 + $0x38] sm:$0xf]
    %v195 = vld [vmem:[%s5 + $0x3c] sm:$0xf]
    %v212 = vunpack.c.l.b16 %v180
    %v213 = vunpack.c.l.b16 %v181
    %v214 = vunpack.c.l.b16 %v182
    %v215 = vunpack.c.l.b16 %v183
    %v216 = vunpack.c.l.b16 %v184
    %v217 = vunpack.c.l.b16 %v185
    %v218 = vunpack.c.l.b16 %v186
    %v219 = vunpack.c.l.b16 %v187
    %v220 = vunpack.c.l.b16 %v188
    %v221 = vunpack.c.l.b16 %v189
    %v222 = vunpack.c.l.b16 %v190
    %v223 = vunpack.c.l.b16 %v191
    %v224 = vunpack.c.l.b16 %v192
    %v225 = vunpack.c.l.b16 %v193
    %v226 = vunpack.c.l.b16 %v194
    %v227 = vunpack.c.l.b16 %v195
    %v228 = vpack.c.b16 %v213, %v212
    %v229 = vpack.c.b16 %v215, %v214
    %v230 = vpack.c.b16 %v217, %v216
    %v231 = vpack.c.b16 %v219, %v218
    %v232 = vpack.c.b16 %v221, %v220
    %v233 = vpack.c.b16 %v223, %v222
    %v234 = vpack.c.b16 %v225, %v224
    %v235 = vpack.c.b16 %v227, %v226
    %244 = vmatprep.subr.bf16.mxu0 0
    %245 = vmatpush1.bf16.msra.mxu0 %v235
    %246 = vmatprep.subr.bf16.mxu0 0
    %247 = vmatpush1.bf16.msra.mxu0 %v234
    %248 = vmatprep.subr.bf16.mxu0 0
    %249 = vmatpush1.bf16.msra.mxu0 %v233
    %250 = vmatprep.subr.bf16.mxu0 0
    %251 = vmatpush1.bf16.msra.mxu0 %v232
    %252 = vmatprep.subr.bf16.mxu0 0
    %253 = vmatpush1.bf16.msra.mxu0 %v231
    %254 = vmatprep.subr.bf16.mxu0 0
    %255 = vmatpush1.bf16.msra.mxu0 %v230
    %256 = vmatprep.subr.bf16.mxu0 0
    %257 = vmatpush1.bf16.msra.mxu0 %v229
    %258 = vmatprep.subr.bf16.mxu0 0
    %259 = vmatpush1.bf16.msra.mxu0 %v228
    %260 = vmatprep.subr.bf16.mxu0 0
    %261 = vmatpush2.bf16.msra.mxu0 0
    %262 = vmatprep.subr.bf16.mxu0 0
    %263 = vmatpush2.bf16.msra.mxu0 0
    %264 = vmatprep.subr.bf16.mxu0 0
    %265 = vmatpush2.bf16.msra.mxu0 0
    %266 = vmatprep.subr.bf16.mxu0 0
    %267 = vmatpush2.bf16.msra.mxu0 0
    %268 = vmatprep.subr.bf16.mxu0 0
    %269 = vmatpush2.bf16.msra.mxu0 0
    %270 = vmatprep.subr.bf16.mxu0 0
    %271 = vmatpush2.bf16.msra.mxu0 0
    %272 = vmatprep.subr.bf16.mxu0 0
    %273 = vmatpush2.bf16.msra.mxu0 0
    %274 = vmatprep.subr.bf16.mxu0 0
    %275 = vmatpush2.bf16.msra.mxu0 0
    %276 = vmatprep.mubr.bf16.mxu0 0
    %277 = vmatmul.mubr.bf16.gmra.mxu0 %v179
    %v278 = vpop.f32.mrf.mxu0
    %v279 = vadd.f32 0.0, %v278
    %v280 = vpop.f32.mrf.mxu0
    %v281 = vpop.f32.mrf.mxu0
    %v282 = vadd.f32 0.0, %v281
    %v283 = vpop.f32.mrf.mxu0
    %284 = vdwg.mxu0
    %v285 = vadd.f32 %v177, %v279
    %v286 = vadd.f32 %v178, %v282
    %287 = vst.msk [vmem:[#allocation3] sm:$0xff] %vm130, %v285
    %288 = vst.msk [vmem:[#allocation3 + $0x8] sm:$0xff] %vm130, %v286
    // Predicated region
    $region34: #{tpu_custom_call.1} parent=1 // pred_check
      _
    $region35: #{tpu_custom_call.1} parent=1 // pred_check_branch
      %290 = sbr.rel (0) target = $region37
    $region36: #{tpu_custom_call.1} parent=1 // pred_region
      %s292 = ssub.s32 256, 256
      %293 = vsyncadd [#allocation4], %s292
      %s294 = sshll.u32 [#allocation3], 4
      %s295 = int_to_ptr.vmem [resolvable:$true] %s294
      %300 = dma.vmem_to_hbm [thread:$0]  %s295, 256, %s7, [#allocation4], 128, 128, 8
    $region37: #{tpu_custom_call.1} parent=1 // pred_fallthru
      _
    // Predicated region
    $region38: #{tpu_custom_call.1} parent=1 // pred_check
      _
    $region39: #{tpu_custom_call.1} parent=1 // pred_check_branch
      %302 = sbr.rel (0) target = $region41
    $region40: #{tpu_custom_call.1} parent=1 // pred_region
      %303 = dma.done [#allocation4], 256
    $region41: #{tpu_custom_call.1} parent=1 // pred_fallthru
      _
    %304 = vsyncpa [#allocation4], 1

</llo_original>
